<compile_context>
chip_gen: v6e
topology: v6e:2x2x1
jax: 0.10.0
libtpu: 0.0.40
codegen_flags: <defaults>
</compile_context>

<pallas_src>
import functools

import jax
import jax.numpy as jnp
import numpy as np
from jax import lax
from jax.experimental import pallas as pl
from jax.experimental.pallas import tpu as pltpu


def _round_up(x, m):
    return int(pl.cdiv(int(x), int(m))) * int(m)


def _xent_kernel(x_ref, y_ref, xent_ref, ce_acc, cnt_acc, *, nop_idx, seq_len):
    si = pl.program_id(1)
    ns = pl.num_programs(1)

    @pl.when(si == 0)
    def _init():
        ce_acc[...] = jnp.zeros_like(ce_acc)
        cnt_acc[...] = jnp.zeros_like(cnt_acc)

    x = x_ref[...].astype(jnp.float32)          # (TS, V) logits
    y = y_ref[...].astype(jnp.float32)          # (TS, V) probability targets
    TS, V = x.shape

    # Row validity: the final sequence tile may run past S (no wrapper padding),
    # so its out-of-bounds rows hold garbage and must not contribute.
    row = si * TS + lax.broadcasted_iota(jnp.int32, (TS, 1), 0)
    row_valid = row < seq_len                                        # (TS, 1)

    # Token mask: first-occurrence argmax(y, -1) != nop_idx (exact tie-breaking,
    # matches torch.argmax) via int32 lane iota + min over tied-max lanes.
    ymax = jnp.max(y, axis=-1, keepdims=True)                        # (TS, 1)
    lane = lax.broadcasted_iota(jnp.int32, (TS, V), 1)
    arg = jnp.min(jnp.where(y == ymax, lane, V), axis=-1, keepdims=True)
    keep = jnp.logical_and(row_valid, arg != nop_idx)                # (TS, 1)

    # Soft-target cross entropy: -sum(y * log_softmax(x), -1)
    xs = x - jnp.max(x, axis=-1, keepdims=True)
    lse = jnp.log(jnp.sum(jnp.exp(xs), axis=-1, keepdims=True))      # (TS, 1)
    ce = -jnp.sum(y * (xs - lse), axis=-1, keepdims=True)            # (TS, 1)

    # Elementwise vector accumulation; selects (not multiplies) so NaNs from
    # uninitialized tail rows can never leak into the sums.
    ce_acc[...] += jnp.where(keep, ce, 0.0)
    cnt_acc[...] += jnp.where(keep, 1.0, 0.0)

    @pl.when(si == ns - 1)
    def _finalize():
        tot = jnp.sum(ce_acc[...], axis=0, keepdims=True)            # (1, 1)
        cnt = jnp.sum(cnt_acc[...], axis=0, keepdims=True)           # (1, 1)
        # a batch row with no kept tokens has tot == 0 exactly -> 0 / 1 = 0
        xent_row = tot / jnp.maximum(cnt, 1.0)
        xent_ref[...] = jnp.broadcast_to(xent_row, (8, 128)).astype(jnp.float32)


def cevae_loss(x_hat, y, z_mean, z_logvar, nop_idx):
    B, S, V = x_hat.shape

    # ---- tile sizing: ~4 MiB per streamed input per pipeline buffer ----
    itemsize = max(jnp.dtype(x_hat.dtype).itemsize, jnp.dtype(y.dtype).itemsize)
    v_lanes = _round_up(V, 128)                       # VMEM lane footprint/row
    budget = 4 << 20
    ts_cap = max(16, (budget // (v_lanes * itemsize)) // 16 * 16)
    ts_cap = min(ts_cap, 2048)
    if S <= ts_cap:
        TS = int(S)                 # whole sequence in one block (full-dim legal)
        ns = 1
    else:
        TS = int(ts_cap)            # multiple of 16; ragged tail masked in-kernel
        ns = int(pl.cdiv(S, TS))

    # ---- explicit VMEM budget (v7x: 64 MiB physical; v5e/v6e: 128 MiB) ----
    in_block = TS * v_lanes * itemsize               # per input, per buffer
    f32_block = TS * v_lanes * 4                     # compiler temporaries
    acc_bytes = 2 * _round_up(TS, 8) * 128 * 4       # (TS,1) accumulators
    needed = 2 * 2 * in_block + 6 * f32_block + acc_bytes + (2 << 20)
    try:
        vmem_phys = int(pltpu.get_tpu_info().vmem_capacity_bytes)
    except Exception:
        vmem_phys = 0
    if vmem_phys <= (32 << 20):
        vmem_phys = 64 << 20
    vmem_limit = int(min(max(needed, 32 << 20), int(vmem_phys * 0.9)))

    kernel = functools.partial(_xent_kernel, nop_idx=int(nop_idx), seq_len=int(S))

    cost = pl.CostEstimate(
        flops=int(8 * B * S * V),
        transcendentals=int(B * S * V),
        bytes_accessed=int(B * S * V * (jnp.dtype(x_hat.dtype).itemsize
                                        + jnp.dtype(y.dtype).itemsize)
                           + B * 8 * 128 * 4),
    )

    xent_tiles = pl.pallas_call(
        kernel,
        grid=(B, ns),
        in_specs=[
            pl.BlockSpec((None, TS, V), lambda bi, si: (bi, si, 0)),
            pl.BlockSpec((None, TS, V), lambda bi, si: (bi, si, 0)),
        ],
        out_specs=pl.BlockSpec((None, 8, 128), lambda bi, si: (bi, 0, 0)),
        out_shape=jax.ShapeDtypeStruct((B, 8, 128), jnp.float32),
        scratch_shapes=[
            pltpu.VMEM((TS, 1), jnp.float32),   # running sum of kept CE
            pltpu.VMEM((TS, 1), jnp.float32),   # running count of kept tokens
        ],
        compiler_params=pltpu.CompilerParams(
            dimension_semantics=("parallel", "arbitrary"),
            vmem_limit_bytes=vmem_limit),
        cost_estimate=cost,
    )(x_hat, y)

    # every (8,128) tile is broadcast-filled with its batch row's partial value
    xent = jnp.sum(xent_tiles[:, 0, 0]) / B

    # KL term: O(B*Z) elementwise -- plain JAX per the perf review (removes two
    # pipelined kernel inputs and one kernel output; XLA runs it at HBM rate).
    zm = z_mean.astype(jnp.float32)
    zlv = z_logvar.astype(jnp.float32)
    kl = -0.5 * jnp.sum(1.0 + zlv - zm * zm - jnp.exp(zlv))
    return xent, kl


def cevae_loss_ref(x_hat, y, z_mean, z_logvar, nop_idx):
    """Pure-JAX reference mirroring the PyTorch semantics."""
    arg = jnp.argmax(y, axis=-1)
    mask = arg != nop_idx
    count = jnp.sum(mask, axis=1, keepdims=True).astype(jnp.float32)
    weights = jnp.where(mask, 1.0 / jnp.maximum(count, 1.0), 0.0)
    logsm = jax.nn.log_softmax(x_hat.astype(jnp.float32), axis=-1)
    ce = -jnp.sum(y.astype(jnp.float32) * logsm, axis=-1)
    xent = jnp.sum(weights * ce) / x_hat.shape[0]
    zm = z_mean.astype(jnp.float32)
    zlv = z_logvar.astype(jnp.float32)
    kl = -0.5 * jnp.sum(1.0 + zlv - zm ** 2 - jnp.exp(zlv))
    return xent, kl


def _run_case(key, B, S, V, Z, nop_idx, dtype=jnp.float32, rtol=1e-4, atol=1e-4):
    kx, kt, km, kv = jax.random.split(key, 4)
    x_hat = jax.random.normal(kx, (B, S, V), dtype=jnp.float32).astype(dtype)
    targets = jax.random.randint(kt, (B, S), 0, V)
    y = jax.nn.one_hot(targets, V, dtype=dtype)
    z_mean = (0.5 * jax.random.normal(km, (B, Z), dtype=jnp.float32)).astype(dtype)
    z_logvar = (0.5 * jax.random.normal(kv, (B, Z), dtype=jnp.float32)).astype(dtype)

    xent, kl = cevae_loss(x_hat, y, z_mean, z_logvar, nop_idx)
    jax.block_until_ready((xent, kl))

    xent_r, kl_r = cevae_loss_ref(x_hat, y, z_mean, z_logvar, nop_idx)
    np.testing.assert_allclose(np.asarray(xent), np.asarray(xent_r),
                               rtol=rtol, atol=atol)
    np.testing.assert_allclose(np.asarray(kl), np.asarray(kl_r),
                               rtol=rtol, atol=atol)


if __name__ == "__main__":
    key = jax.random.PRNGKey(0)
    k1, k2, k3 = jax.random.split(key, 3)

    # primary small-shape case (batch=2, seq=8, vocab=32, latent=16)
    _run_case(k1, B=2, S=8, V=32, Z=16, nop_idx=31)
    # ragged vocab + ragged sequence handled fully in-kernel (no wrapper padding)
    _run_case(k2, B=2, S=10, V=33, Z=16, nop_idx=5)
    # bf16 passthrough (half the streamed HBM bytes; f32 compute in-register)
    _run_case(k3, B=2, S=12, V=40, Z=16, nop_idx=3, dtype=jnp.bfloat16,
              rtol=5e-3, atol=5e-3)

    print("KERNEL_OK")
</pallas_src>

<mosaic_0001>
module attributes {stable_mosaic.version = 11 : i64} {
  func.func @_xent_kernel(%arg0: i32, %arg1: i32, %arg2: memref<1x8x32xf32, #tpu.memory_space<vmem>>, %arg3: memref<1x8x32xf32, #tpu.memory_space<vmem>>, %arg4: memref<1x8x128xf32, #tpu.memory_space<vmem>>, %arg5: memref<8x1xf32, #tpu.memory_space<vmem>>, %arg6: memref<8x1xf32, #tpu.memory_space<vmem>>) attributes {dimension_semantics = [#tpu.dimension_semantics<parallel>, #tpu.dimension_semantics<arbitrary>], iteration_bounds = array<i64: 2, 1>, scalar_prefetch = 0 : i64, scratch_operands = 2 : i64, tpu.core_type = #tpu.core_type<tc>, window_params = [{transform_indices = @transform_0, window_bounds = array<i64: 1, 8, 32>}, {transform_indices = @transform_1, window_bounds = array<i64: 1, 8, 32>}, {transform_indices = @transform_2, window_bounds = array<i64: 1, 8, 128>}]} {
    %c0_i32 = arith.constant 0 : i32
    %0 = arith.cmpi eq, %arg1, %c0_i32 : i32
    %1 = arith.extui %0 : i1 to i32
    %c0_i32_0 = arith.constant 0 : i32
    %2 = arith.cmpi ne, %1, %c0_i32_0 : i32
    scf.if %2 {
      %cst_25 = arith.constant 0.000000e+00 : f32
      %54 = vector.broadcast %cst_25 : f32 to vector<8x1xf32>
      %c0_26 = arith.constant 0 : index
      %c0_27 = arith.constant 0 : index
      %55 = vector.load %arg5[%c0_26, %c0_27] : memref<8x1xf32, #tpu.memory_space<vmem>>, vector<8x1xf32>
      tpu.vector_store %arg5[%c0_26, %c0_27], %54 {strides = array<i32>} : memref<8x1xf32, #tpu.memory_space<vmem>>, vector<8x1xf32>,
      %cst_28 = arith.constant 0.000000e+00 : f32
      %56 = vector.broadcast %cst_28 : f32 to vector<8x1xf32>
      %c0_29 = arith.constant 0 : index
      %c0_30 = arith.constant 0 : index
      %57 = vector.load %arg6[%c0_29, %c0_30] : memref<8x1xf32, #tpu.memory_space<vmem>>, vector<8x1xf32>
      tpu.vector_store %arg6[%c0_29, %c0_30], %56 {strides = array<i32>} : memref<8x1xf32, #tpu.memory_space<vmem>>, vector<8x1xf32>,
    } else {
    }
    %c0 = arith.constant 0 : index
    %c0_1 = arith.constant 0 : index
    %c0_2 = arith.constant 0 : index
    %3 = vector.load %arg2[%c0, %c0_1, %c0_2] : memref<1x8x32xf32, #tpu.memory_space<vmem>>, vector<1x8x32xf32>
    %4 = vector.shape_cast %3 : vector<1x8x32xf32> to vector<8x32xf32>
    %c0_3 = arith.constant 0 : index
    %c0_4 = arith.constant 0 : index
    %c0_5 = arith.constant 0 : index
    %5 = vector.load %arg3[%c0_3, %c0_4, %c0_5] : memref<1x8x32xf32, #tpu.memory_space<vmem>>, vector<1x8x32xf32>
    %6 = vector.shape_cast %5 : vector<1x8x32xf32> to vector<8x32xf32>
    %c8_i32 = arith.constant 8 : i32
    %7 = arith.muli %arg1, %c8_i32 : i32
    %8 = tpu.iota {dimensions = array<i32: 0>} : vector<8x1xi32>
    %9 = vector.broadcast %7 : i32 to vector<8x1xi32>
    %10 = arith.addi %9, %8 : vector<8x1xi32>
    %c8_i32_6 = arith.constant 8 : i32
    %11 = vector.broadcast %c8_i32_6 : i32 to vector<8x1xi32>
    %12 = arith.cmpi slt, %10, %11 : vector<8x1xi32>
    %cst = arith.constant dense<0xFF800000> : vector<8xf32>
    %13 = vector.multi_reduction <maximumf>, %6, %cst [1] : vector<8x32xf32> to vector<8xf32>
    %14 = vector.shape_cast %13 : vector<8xf32> to vector<8x1xf32>
    %15 = tpu.iota {dimensions = array<i32: 1>} : vector<8x32xi32>
    %16 = vector.broadcast %14 : vector<8x1xf32> to vector<8x32xf32>
    %17 = arith.cmpf oeq, %6, %16 : vector<8x32xf32>
    %c32_i32 = arith.constant 32 : i32
    %18 = vector.broadcast %c32_i32 : i32 to vector<8x32xi32>
    %19 = arith.select %17, %15, %18 : vector<8x32xi1>, vector<8x32xi32>
    %cst_7 = arith.constant dense<2147483647> : vector<8xi32>
    %20 = vector.multi_reduction <minsi>, %19, %cst_7 [1] : vector<8x32xi32> to vector<8xi32>
    %21 = vector.shape_cast %20 : vector<8xi32> to vector<8x1xi32>
    %c31_i32 = arith.constant 31 : i32
    %22 = vector.broadcast %c31_i32 : i32 to vector<8x1xi32>
    %23 = arith.cmpi ne, %21, %22 : vector<8x1xi32>
    %24 = arith.andi %12, %23 : vector<8x1xi1>
    %cst_8 = arith.constant dense<0xFF800000> : vector<8xf32>
    %25 = vector.multi_reduction <maximumf>, %4, %cst_8 [1] : vector<8x32xf32> to vector<8xf32>
    %26 = vector.shape_cast %25 : vector<8xf32> to vector<8x1xf32>
    %27 = vector.broadcast %26 : vector<8x1xf32> to vector<8x32xf32>
    %28 = arith.subf %4, %27 : vector<8x32xf32>
    %29 = math.exp %28 : vector<8x32xf32>
    %cst_9 = arith.constant dense<0.000000e+00> : vector<8xf32>
    %30 = vector.multi_reduction <add>, %29, %cst_9 [1] : vector<8x32xf32> to vector<8xf32>
    %31 = vector.shape_cast %30 : vector<8xf32> to vector<8x1xf32>
    %32 = math.log %31 : vector<8x1xf32>
    %33 = vector.broadcast %32 : vector<8x1xf32> to vector<8x32xf32>
    %34 = arith.subf %28, %33 : vector<8x32xf32>
    %35 = arith.mulf %6, %34 : vector<8x32xf32>
    %cst_10 = arith.constant dense<0.000000e+00> : vector<8xf32>
    %36 = vector.multi_reduction <add>, %35, %cst_10 [1] : vector<8x32xf32> to vector<8xf32>
    %37 = vector.shape_cast %36 : vector<8xf32> to vector<8x1xf32>
    %cst_11 = arith.constant 0.000000e+00 : f32
    %38 = vector.broadcast %cst_11 : f32 to vector<8x1xf32>
    %39 = arith.subf %38, %37 : vector<8x1xf32>
    %c0_12 = arith.constant 0 : index
    %c0_13 = arith.constant 0 : index
    %40 = vector.load %arg5[%c0_12, %c0_13] : memref<8x1xf32, #tpu.memory_space<vmem>>, vector<8x1xf32>
    %cst_14 = arith.constant 0.000000e+00 : f32
    %41 = vector.broadcast %cst_14 : f32 to vector<8x1xf32>
    %42 = arith.select %24, %39, %41 : vector<8x1xi1>, vector<8x1xf32>
    %43 = arith.addf %40, %42 : vector<8x1xf32>
    %c0_15 = arith.constant 0 : index
    %c0_16 = arith.constant 0 : index
    %44 = vector.load %arg5[%c0_15, %c0_16] : memref<8x1xf32, #tpu.memory_space<vmem>>, vector<8x1xf32>
    tpu.vector_store %arg5[%c0_15, %c0_16], %43 {strides = array<i32>} : memref<8x1xf32, #tpu.memory_space<vmem>>, vector<8x1xf32>,
    %c0_17 = arith.constant 0 : index
    %c0_18 = arith.constant 0 : index
    %45 = vector.load %arg6[%c0_17, %c0_18] : memref<8x1xf32, #tpu.memory_space<vmem>>, vector<8x1xf32>
    %cst_19 = arith.constant 1.000000e+00 : f32
    %cst_20 = arith.constant 0.000000e+00 : f32
    %46 = vector.broadcast %cst_19 : f32 to vector<8x1xf32>
    %47 = vector.broadcast %cst_20 : f32 to vector<8x1xf32>
    %48 = arith.select %24, %46, %47 : vector<8x1xi1>, vector<8x1xf32>
    %49 = arith.addf %45, %48 : vector<8x1xf32>
    %c0_21 = arith.constant 0 : index
    %c0_22 = arith.constant 0 : index
    %50 = vector.load %arg6[%c0_21, %c0_22] : memref<8x1xf32, #tpu.memory_space<vmem>>, vector<8x1xf32>
    tpu.vector_store %arg6[%c0_21, %c0_22], %49 {strides = array<i32>} : memref<8x1xf32, #tpu.memory_space<vmem>>, vector<8x1xf32>,
    %c0_i32_23 = arith.constant 0 : i32
    %51 = arith.cmpi eq, %arg1, %c0_i32_23 : i32
    %52 = arith.extui %51 : i1 to i32
    %c0_i32_24 = arith.constant 0 : i32
    %53 = arith.cmpi ne, %52, %c0_i32_24 : i32
    scf.if %53 {
      %c0_25 = arith.constant 0 : index
      %c0_26 = arith.constant 0 : index
      %54 = vector.load %arg5[%c0_25, %c0_26] : memref<8x1xf32, #tpu.memory_space<vmem>>, vector<8x1xf32>
      %cst_27 = arith.constant dense<0.000000e+00> : vector<1xf32>
      %55 = vector.multi_reduction <add>, %54, %cst_27 [0] : vector<8x1xf32> to vector<1xf32>
      %56 = vector.shape_cast %55 : vector<1xf32> to vector<1x1xf32>
      %c0_28 = arith.constant 0 : index
      %c0_29 = arith.constant 0 : index
      %57 = vector.load %arg6[%c0_28, %c0_29] : memref<8x1xf32, #tpu.memory_space<vmem>>, vector<8x1xf32>
      %cst_30 = arith.constant dense<0.000000e+00> : vector<1xf32>
      %58 = vector.multi_reduction <add>, %57, %cst_30 [0] : vector<8x1xf32> to vector<1xf32>
      %59 = vector.shape_cast %58 : vector<1xf32> to vector<1x1xf32>
      %cst_31 = arith.constant 1.000000e+00 : f32
      %60 = vector.broadcast %cst_31 : f32 to vector<1x1xf32>
      %61 = arith.maximumf %59, %60 : vector<1x1xf32>
      %62 = arith.divf %56, %61 : vector<1x1xf32>
      %63 = vector.shape_cast %62 : vector<1x1xf32> to vector<1x1xf32>
      %64 = vector.broadcast %63 : vector<1x1xf32> to vector<8x128xf32>
      %c0_32 = arith.constant 0 : index
      %c0_33 = arith.constant 0 : index
      %c0_34 = arith.constant 0 : index
      %65 = vector.load %arg4[%c0_32, %c0_33, %c0_34] : memref<1x8x128xf32, #tpu.memory_space<vmem>>, vector<1x8x128xf32>
      %66 = vector.shape_cast %65 : vector<1x8x128xf32> to vector<8x128xf32>
      %67 = vector.shape_cast %64 : vector<8x128xf32> to vector<1x8x128xf32>
      tpu.vector_store %arg4[%c0_32, %c0_33, %c0_34], %67 {strides = array<i32>} : memref<1x8x128xf32, #tpu.memory_space<vmem>>, vector<1x8x128xf32>,
    } else {
    }
    return
  }
  func.func @transform_0(%arg0: i32, %arg1: i32) -> (i32, i32, i32) {
    %c0_i32 = arith.constant 0 : i32
    %c0_i32_0 = arith.constant 0 : i32
    return %arg0, %arg1, %c0_i32 : i32, i32, i32
  }
  func.func @transform_1(%arg0: i32, %arg1: i32) -> (i32, i32, i32) {
    %c0_i32 = arith.constant 0 : i32
    %c0_i32_0 = arith.constant 0 : i32
    return %arg0, %arg1, %c0_i32 : i32, i32, i32
  }
  func.func @transform_2(%arg0: i32, %arg1: i32) -> (i32, i32, i32) {
    %c0_i32 = arith.constant 0 : i32
    %c0_i32_0 = arith.constant 0 : i32
    %c0_i32_1 = arith.constant 0 : i32
    return %arg0, %c0_i32, %c0_i32_0 : i32, i32, i32
  }
}

</mosaic_0001>

<llo_original>
// kernel: tpu_custom_call.1
$region0: #{tpu_custom_call.1}
  #allocation0 [shape = 'u32[]', space=smem, size = 0x4, offset = 0x4, fixed_abs, tag = 'smem constant byte address 0x4 - core index']
  #allocation1 [shape = 'u32[144,128]{1,0:T(1,128)}', space=vmem, size = 0x12000, scoped, tag = 'internal scratch']
  #allocation2 [shape = 'f32[8,1]{1,0:T(8,128)}', space=vmem, size = 0x1000, scoped, tag = 'scratch operand']
  #allocation3 [shape = 'f32[8,1]{1,0:T(8,128)}', space=vmem, size = 0x1000, scoped, tag = 'scratch operand']
  %s0 = inlined_call_operand.hbm [shape: f32[2,8,32], index: 0, kind: input, shape index: {}]
  %s1 = inlined_call_operand.hbm [shape: f32[2,8,32], index: 1, kind: input, shape index: {}]
  %s2 = inlined_call_operand.hbm [shape: f32[2,8,128], index: 2, kind: output, shape index: {}]
  %s3 = sld [smem:[#allocation0]]
  $region57: #{tpu_custom_call.1} parent=0
    _
  %s5 = ssub.s32 1, %s3
  %s6 = scalar_select 0, %s5, %s3
  $region1: #{tpu_custom_call.1} parent=0
    #allocation4 [shape = 'u8[8192]{0}', space=vmem, size = 0x2000, scoped, tag = 'input window, operand 0']
    #allocation5 [shape = 's32[2]{0}', space=sflag, size = 0x8, scoped, tag = 'scoped memory for tpu_custom_call.1']
    #allocation6 [shape = 's32[2]{0}', space=sflag, size = 0x8, scoped, tag = 'scoped memory for tpu_custom_call.1']
    #allocation7 [shape = 'u8[8192]{0}', space=vmem, size = 0x2000, scoped, tag = 'input window, operand 1']
    #allocation8 [shape = 's32[2]{0}', space=sflag, size = 0x8, scoped, tag = 'scoped memory for tpu_custom_call.1']
    #allocation9 [shape = 'u8[8192]{0}', space=vmem, size = 0x2000, scoped, tag = 'output window, operand 0']
    %7 = vsyncpa [#allocation5], 0
    %s8 = scalar_lea.sflag [#allocation5], 1
    %9 = vsyncpa %s8, 0
    %10 = vsyncpa [#allocation8], 0
    %s11 = scalar_lea.sflag [#allocation8], 1
    %12 = vsyncpa %s11, 0
    %13 = vsyncpa [#allocation6], 0
    %s14 = scalar_lea.sflag [#allocation6], 1
    %15 = vsyncpa %s14, 0
    loop: start=0, step=1, limit=4
    $region2: #{tpu_custom_call.1} parent=1 // loop_pre_header
      _
    $region3: #{tpu_custom_call.1} parent=1 // loop_header
      %s17 = sphi 0, %s21
      %p18 = scmp.ge.s32.totalorder %s17, 4
      %s24 = sphi 0, %s36
      %s25 = sphi 0, %s32
      %s26 = sphi 0, %s24
      %s27 = sphi 0, %s25
      %s28 = sphi 0, %s26
      %s29 = sphi 0, %s27
      %s41 = sphi 0, %s43
      %s44 = sphi 0, %s41
      %s45 = sphi 0, %s44
      %s61 = sphi 0, %s45
      %s69 = sphi 0, %s71
      %s72 = sphi 0, %s69
      %s73 = sphi 0, %s72
      %s89 = sphi 0, %s73
      %s95 = sphi 0, %s97
      %s98 = sphi 0, %s95
      %s99 = sphi 0, %s98
      %s115 = sphi 0, %s99
    $region4: #{tpu_custom_call.1} parent=1 // loop_header_branch
      %20 = sbr.rel (%p18) target = $region8
    $region5: #{tpu_custom_call.1} parent=1 // loop_body
      %s22 = ssub.s32 %s17, 1
      %s23 = ssub.s32 %s17, 2
      %s30 = sadd.s32 1, %s25
      %p31 = scmp.ge.s32.totalorder %s30, 1
      %s32 = scalar_select %p31, 0, %s30
      %s33 = sadd.s32 1, %s24
      %s34 = scalar_select %p31, %s33, %s24
      %p35 = scmp.ge.s32.totalorder %s34, 2
      %s36 = scalar_select %p35, 0, %s34
      %s37 = ssub.s32 %s24, %s36
      %s38 = ssub.s32 %s25, %s32
      %s39 = sor.u32 %s37, %s38
      %p40 = scmp.eq.s32.totalorder %s39, 0
      %s42 = sadd.s32 %s41, 1
      %s43 = scalar_select %p40, %s41, %s42
      %p46 = pneg %p40
      %p47 = scmp.eq.s32.totalorder %s17, 1
      %p48 = por %p46, %p47
      %p49 = scmp.ne.s32.totalorder %s41, %s44
      %p50 = scmp.eq.s32.totalorder %s17, 0
      %p51 = por %p49, %p50
      %p52 = scmp.ne.s32.totalorder %s41, %s44
      %p53 = scmp.eq.s32.totalorder %s22, 1
      %p54 = por %p52, %p53
      %p55 = scmp.ne.s32.totalorder %s44, %s45
      %p56 = scmp.eq.s32.totalorder %s22, 0
      %p57 = por %p55, %p56
      %p58 = scmp.ne.s32.totalorder %s44, %s45
      %p59 = scmp.eq.s32.totalorder %s23, 1
      %p60 = por %p58, %p59
      %p62 = scmp.ne.s32.totalorder %s45, %s61
      %p63 = scmp.eq.s32.totalorder %s23, 0
      %p64 = por %p62, %p63
      %s65 = ssub.s32 %s24, %s36
      %s66 = ssub.s32 %s25, %s32
      %s67 = sor.u32 %s65, %s66
      %p68 = scmp.eq.s32.totalorder %s67, 0
      %s70 = sadd.s32 %s69, 1
      %s71 = scalar_select %p68, %s69, %s70
      %p74 = pneg %p68
      %p75 = scmp.eq.s32.totalorder %s17, 1
      %p76 = por %p74, %p75
      %p77 = scmp.ne.s32.totalorder %s69, %s72
      %p78 = scmp.eq.s32.totalorder %s17, 0
      %p79 = por %p77, %p78
      %p80 = scmp.ne.s32.totalorder %s69, %s72
      %p81 = scmp.eq.s32.totalorder %s22, 1
      %p82 = por %p80, %p81
      %p83 = scmp.ne.s32.totalorder %s72, %s73
      %p84 = scmp.eq.s32.totalorder %s22, 0
      %p85 = por %p83, %p84
      %p86 = scmp.ne.s32.totalorder %s72, %s73
      %p87 = scmp.eq.s32.totalorder %s23, 1
      %p88 = por %p86, %p87
      %p90 = scmp.ne.s32.totalorder %s73, %s89
      %p91 = scmp.eq.s32.totalorder %s23, 0
      %p92 = por %p90, %p91
      %s93 = ssub.s32 %s24, %s36
      %p94 = scmp.eq.s32.totalorder %s93, 0
      %s96 = sadd.s32 %s95, 1
      %s97 = scalar_select %p94, %s95, %s96
      %p100 = pneg %p94
      %p101 = scmp.eq.s32.totalorder %s17, 1
      %p102 = por %p100, %p101
      %p103 = scmp.ne.s32.totalorder %s95, %s98
      %p104 = scmp.eq.s32.totalorder %s17, 0
      %p105 = por %p103, %p104
      %p106 = scmp.ne.s32.totalorder %s95, %s98
      %p107 = scmp.eq.s32.totalorder %s22, 1
      %p108 = por %p106, %p107
      %p109 = scmp.ne.s32.totalorder %s98, %s99
      %p110 = scmp.eq.s32.totalorder %s22, 0
      %p111 = por %p109, %p110
      %p112 = scmp.ne.s32.totalorder %s98, %s99
      %p113 = scmp.eq.s32.totalorder %s23, 1
      %p114 = por %p112, %p113
      %p116 = scmp.ne.s32.totalorder %s99, %s115
      %p117 = scmp.eq.s32.totalorder %s23, 0
      %p118 = por %p116, %p117
      %p119 = scmp.le.s32.totalorder 1, %s17
      %p120 = scmp.lt.s32.totalorder %s17, 3
      %p121 = pnand %p119, %p120
      %p122 = pneg %p121
      // Predicated region
      $region9: #{tpu_custom_call.1} parent=5 // pred_check
        _
      $region10: #{tpu_custom_call.1} parent=5 // pred_check_branch
        %124 = sbr.rel (%p121) target = $region12
      $region11: #{tpu_custom_call.1} parent=5 // pred_region
        %s125 = ssub.s32 %s17, 1
      $region12: #{tpu_custom_call.1} parent=5 // pred_fallthru
        _
      %p126 = scmp.lt.s32.totalorder %s17, 2
      // Predicated region
      $region13: #{tpu_custom_call.1} parent=5 // pred_check
        %p127 = pneg %p126
      $region14: #{tpu_custom_call.1} parent=5 // pred_check_branch
        %129 = sbr.rel (%p127) target = $region16
      $region15: #{tpu_custom_call.1} parent=5 // pred_region
        // Predicated region
        $region17: #{tpu_custom_call.1} parent=15 // pred_check
          %p130 = pneg %p51
        $region18: #{tpu_custom_call.1} parent=15 // pred_check_branch
          %132 = sbr.rel (%p130) target = $region20
        $region19: #{tpu_custom_call.1} parent=15 // pred_region
          %s133 = sand.u32 %s41, 1
          %s134 = scalar_lea.sflag [#allocation5], %s133
          %s135 = sand.u32 %s41, 1
          %s136 = smul.addr %s135, 8
          %s137 = scalar_lea.vmem [#allocation4], %s136
          %s139 = ssub.s32 128, 128
          %140 = vsyncadd %s134, %s139
          %s141 = sadd.s32 %s25, %s24
          %s142 = smul.addr %s141, 128
          %s143 = scalar_lea.hbm %s0, %s142
          %s145 = sshll.u32 %s137, 4
          %s146 = int_to_ptr.vmem [resolvable:$true] %s145
          %148 = dma.hbm_to_vmem [thread:$0]  %s143, 128, %s146, %s134
        $region20: #{tpu_custom_call.1} parent=15 // pred_fallthru
          _
        // Predicated region
        $region21: #{tpu_custom_call.1} parent=15 // pred_check
          %p149 = pneg %p79
        $region22: #{tpu_custom_call.1} parent=15 // pred_check_branch
          %151 = sbr.rel (%p149) target = $region24
        $region23: #{tpu_custom_call.1} parent=15 // pred_region
          %s152 = sand.u32 %s69, 1
          %s153 = scalar_lea.sflag [#allocation8], %s152
          %s154 = sand.u32 %s69, 1
          %s155 = smul.addr %s154, 8
          %s156 = scalar_lea.vmem [#allocation7], %s155
          %s158 = ssub.s32 128, 128
          %159 = vsyncadd %s153, %s158
          %s160 = sadd.s32 %s25, %s24
          %s161 = smul.addr %s160, 128
          %s162 = scalar_lea.hbm %s1, %s161
          %s164 = sshll.u32 %s156, 4
          %s165 = int_to_ptr.vmem [resolvable:$true] %s164
          %167 = dma.hbm_to_vmem [thread:$0]  %s162, 128, %s165, %s153
        $region24: #{tpu_custom_call.1} parent=15 // pred_fallthru
          _
      $region16: #{tpu_custom_call.1} parent=5 // pred_fallthru
        _
      %p168 = scmp.le.s32.totalorder 1, %s17
      %p169 = scmp.lt.s32.totalorder %s17, 3
      %p170 = pnand %p168, %p169
      %p171 = pneg %p170
      // Predicated region
      $region25: #{tpu_custom_call.1} parent=5 // pred_check
        _
      $region26: #{tpu_custom_call.1} parent=5 // pred_check_branch
        %173 = sbr.rel (%p170) target = $region28
      $region27: #{tpu_custom_call.1} parent=5 // pred_region
        %s174 = ssub.s32 %s17, 1
        %s175 = sand.u32 %s44, 1
        %s176 = scalar_lea.sflag [#allocation5], %s175
        %s177 = sand.u32 %s44, 1
        %s178 = smul.addr %s177, 8
        %s179 = scalar_lea.vmem [#allocation4], %s178
        // Predicated region
        $region29: #{tpu_custom_call.1} parent=27 // pred_check
          %p180 = pneg %p57
        $region30: #{tpu_custom_call.1} parent=27 // pred_check_branch
          %182 = sbr.rel (%p180) target = $region32
        $region31: #{tpu_custom_call.1} parent=27 // pred_region
          %183 = dma.done %s176, 128
        $region32: #{tpu_custom_call.1} parent=27 // pred_fallthru
          _
        %s184 = sand.u32 %s72, 1
        %s185 = scalar_lea.sflag [#allocation8], %s184
        %s186 = sand.u32 %s72, 1
        %s187 = smul.addr %s186, 8
        %s188 = scalar_lea.vmem [#allocation7], %s187
        // Predicated region
        $region33: #{tpu_custom_call.1} parent=27 // pred_check
          %p189 = pneg %p85
        $region34: #{tpu_custom_call.1} parent=27 // pred_check_branch
          %191 = sbr.rel (%p189) target = $region36
        $region35: #{tpu_custom_call.1} parent=27 // pred_region
          %192 = dma.done %s185, 128
        $region36: #{tpu_custom_call.1} parent=27 // pred_fallthru
          _
        %s193 = sand.u32 %s44, 1
        %s194 = scalar_lea.sflag [#allocation5], %s193
        %s195 = sand.u32 %s44, 1
        %s196 = smul.addr %s195, 8
        %s197 = scalar_lea.vmem [#allocation4], %s196
        %p198 = pneg %p57
        %p199 = pneg %p54
        %s200 = sand.u32 %s72, 1
        %s201 = scalar_lea.sflag [#allocation8], %s200
        %s202 = sand.u32 %s72, 1
        %s203 = smul.addr %s202, 8
        %s204 = scalar_lea.vmem [#allocation7], %s203
        %p205 = pneg %p85
        %p206 = pneg %p82
        %p207 = pneg %p111
        %p208 = pneg %p108
        %s209 = sand.u32 %s98, 1
        %s210 = scalar_lea.sflag [#allocation6], %s209
        %s211 = sand.u32 %s98, 1
        %s212 = smul.addr %s211, 8
        %s213 = scalar_lea.vmem [#allocation9], %s212
        %p214 = scmp.eq.s32.totalorder %s27, 0
        // Predicated region
        $region37: #{tpu_custom_call.1} parent=27 // pred_check
          %p215 = pneg %p214
        $region38: #{tpu_custom_call.1} parent=27 // pred_check_branch
          %217 = sbr.rel (%p215) target = $region40
        $region39: #{tpu_custom_call.1} parent=27 // pred_region
          %vm218 = vcmask 7168
          %219 = vst.msk [vmem:[#allocation2] sm:$0xff] %vm218, 0.0
          %220 = vst.msk [vmem:[#allocation3] sm:$0xff] %vm218, 0.0
        $region40: #{tpu_custom_call.1} parent=27 // pred_fallthru
          _
        %v221 = vld [vmem:[%s179] sm:$0xff]
        %v222 = vld [vmem:[%s188] sm:$0xff]
        %s223 = smul.u32 %s27, 8
        %v224 = vlaneseq
        %v225 = vshrl.u32 %v224, 7
        %v226 = vstv %s223
        %v227 = vadd.s32 %v226, %v225
        %vm228 = vcmp.lt.s32.totalorder %v227, 8
        %vm229 = vcmask 261120
        %v230 = vsel %vm229, %v222, -inf
        %231 = vmax.xlane.f32.xlu0 %v230
        %v232 = vpop.xlane.xlu0 %231
        %v233 = vlaneseq
        %v234 = vand.u32 %v233, 127
        %vm235 = vcmp.eq.f32.partialorder %v222, %v232
        %v236 = vsel %vm235, %v234, 32
        %v237 = vsel %vm229, %v236, 2147483647
        %v238 = vand.u32 %v237, 65535
        %v239 = vshra.s32 %v237, 16
        %v240 = vcvt.s32.f32 %v238
        %v241 = vcvt.s32.f32 %v239
        %242 = vmin.xlane.f32.xlu0 %v241
        %v243 = vpop.xlane.xlu0 %242
        %vm244 = vcmp.eq.f32.partialorder %v241, %v243
        %v245 = vsel %vm244, %v240, inf
        %246 = vmin.xlane.f32.xlu0 %v245
        %v247 = vpop.xlane.xlu0 %246
        %v248 = vcvt.f32.s32 %v247
        %v249 = vcvt.f32.s32 %v243
        %v250 = vshll.u32 %v249, 16
        %v251 = vadd.s32 %v250, %v248
        %vm252 = vcmp.ne.s32.totalorder %v251, 31
        %vm253 = vmand %vm228, %vm252
        %v254 = vsel %vm229, %v221, -inf
        %255 = vmax.xlane.f32.xlu0 %v254
        %v256 = vpop.xlane.xlu0 %255
        %v257 = vsub.f32 %v221, %v256
        %v258 = vmul.f32 %v257, 1.442695
        %v259 = vpow.pop %v258
        %v260 = vsel %vm229, %v259, 0.0
        %261 = vadd.xlane.f32.xlu0 %v260
        %v262 = vpop.xlane.xlu0 %261
        %v263 = vlog2.pop %v262
        %v264 = vmul.f32 %v263, 0.6931472
        %v265 = vsub.f32 %v257, %v264
        %v266 = vmul.f32 %v222, %v265
        %v267 = vsel %vm229, %v266, 0.0
        %268 = vadd.xlane.f32.xlu0 %v267
        %v269 = vpop.xlane.xlu0 %268
        %v270 = vsub.f32 0.0, %v269
        %v271 = vld [vmem:[#allocation2] sm:$0xff]
        %v272 = vsel %vm253, %v270, 0.0
        %v273 = vadd.f32 %v271, %v272
        %vm274 = vcmask 7168
        %275 = vst.msk [vmem:[#allocation2] sm:$0xff] %vm274, %v273
        %v276 = vld [vmem:[#allocation3] sm:$0xff]
        %v277 = vsel %vm253, 1.0, 0.0
        %v278 = vadd.f32 %v276, %v277
        %279 = vst.msk [vmem:[#allocation3] sm:$0xff] %vm274, %v278
        // Predicated region
        $region41: #{tpu_custom_call.1} parent=27 // pred_check
          %p280 = pneg %p214
        $region42: #{tpu_custom_call.1} parent=27 // pred_check_branch
          %282 = sbr.rel (%p280) target = $region44
        $region43: #{tpu_custom_call.1} parent=27 // pred_region
          %v283 = vld [vmem:[#allocation2] sm:$0xff]
          %v284 = vsel %vm274, %v283, 0.0
          %v285 = vrot.slane %v284, 4
          %v286 = vadd.f32 %v284, %v285
          %v287 = vrot.slane %v286, 2
          %v288 = vadd.f32 %v286, %v287
          %v289 = vrot.slane %v288, 1
          %v290 = vadd.f32 %v288, %v289
          %v291 = vld [vmem:[#allocation3] sm:$0xff]
          %v292 = vsel %vm274, %v291, 0.0
          %v293 = vrot.slane %v292, 4
          %v294 = vadd.f32 %v292, %v293
          %v295 = vrot.slane %v294, 2
          %v296 = vadd.f32 %v294, %v295
          %v297 = vrot.slane %v296, 1
          %v298 = vadd.f32 %v296, %v297
          %v299 = vmax.f32 %v298, 1.0
          %v300 = vrcp.pop %v299
          %v301 = vmul.f32 %v290, %v300
          %303 = vset.pattern.permute.xlu0 0
          %304 = vperm.xlu0 %303, %v301
          %v305 = vpop.permute.xlu0 %304
          %307 = vst [vmem:[%s213] sm:$0xff] %v305
        $region44: #{tpu_custom_call.1} parent=27 // pred_fallthru
          _
        %s308 = sand.u32 %s98, 1
        %s309 = scalar_lea.sflag [#allocation6], %s308
        %s310 = sand.u32 %s98, 1
        %s311 = smul.addr %s310, 8
        %s312 = scalar_lea.vmem [#allocation9], %s311
        // Predicated region
        $region45: #{tpu_custom_call.1} parent=27 // pred_check
          %p313 = pneg %p108
        $region46: #{tpu_custom_call.1} parent=27 // pred_check_branch
          %315 = sbr.rel (%p313) target = $region48
        $region47: #{tpu_custom_call.1} parent=27 // pred_region
          %s317 = ssub.s32 128, 128
          %318 = vsyncadd %s309, %s317
          %s319 = smul.addr %s26, 128
          %s320 = scalar_lea.hbm %s2, %s319
          %s322 = sshll.u32 %s312, 4
          %s323 = int_to_ptr.vmem [resolvable:$true] %s322
          %325 = dma.vmem_to_hbm [thread:$0]  %s323, 128, %s320, %s309
        $region48: #{tpu_custom_call.1} parent=27 // pred_fallthru
          _
      $region28: #{tpu_custom_call.1} parent=5 // pred_fallthru
        _
      %p326 = scmp.le.s32.totalorder 2, %s17
      // Predicated region
      $region49: #{tpu_custom_call.1} parent=5 // pred_check
        %p327 = pneg %p326
      $region50: #{tpu_custom_call.1} parent=5 // pred_check_branch
        %329 = sbr.rel (%p327) target = $region52
      $region51: #{tpu_custom_call.1} parent=5 // pred_region
        %s330 = ssub.s32 %s17, 2
        // Predicated region
        $region53: #{tpu_custom_call.1} parent=51 // pred_check
          %p331 = pneg %p114
        $region54: #{tpu_custom_call.1} parent=51 // pred_check_branch
          %333 = sbr.rel (%p331) target = $region56
        $region55: #{tpu_custom_call.1} parent=51 // pred_region
          %s334 = sand.u32 %s99, 1
          %s335 = scalar_lea.sflag [#allocation6], %s334
          %s336 = sand.u32 %s99, 1
          %s337 = smul.addr %s336, 8
          %s338 = scalar_lea.vmem [#allocation9], %s337
          %339 = dma.done %s335, 128
        $region56: #{tpu_custom_call.1} parent=51 // pred_fallthru
          _
      $region52: #{tpu_custom_call.1} parent=5 // pred_fallthru
        _
    $region6: #{tpu_custom_call.1} parent=1 // loop_footer
      %s21 = sadd.s32 1, %s17
    $region7: #{tpu_custom_call.1} parent=1 // loop_footer_branch
      %16 = sbr.rel target = $region3
    $region8: #{tpu_custom_call.1} parent=1 // loop_exit
      _
    %340 = vsyncpa [#allocation5], 1
    %s341 = scalar_lea.sflag [#allocation5], 1
    %342 = vsyncpa %s341, 1
    %343 = vsyncpa [#allocation8], 1
    %s344 = scalar_lea.sflag [#allocation8], 1
    %345 = vsyncpa %s344, 1
    %346 = vsyncpa [#allocation6], 1
    %s347 = scalar_lea.sflag [#allocation6], 1
    %348 = vsyncpa %s347, 1

</llo_original>
